<compile_context>
chip_gen: v6e
topology: v6e:2x2x1
jax: 0.10.0
libtpu: 0.0.40
codegen_flags: <defaults>
</compile_context>

<pallas_src>
import jax
import jax.numpy as jnp
from jax import lax
from jax.experimental import pallas as pl
from jax.experimental.pallas import tpu as pltpu


def _round_up(x: int, m: int) -> int:
    return ((x + m - 1) // m) * m


def _apply_activation(h, activation: str):
    if activation == "tanh":
        return jnp.tanh(h)
    if activation == "relu":
        return jnp.maximum(h, 0.0)
    if activation == "none":
        return h
    raise NotImplementedError(f"Unrecognized activation type: {activation}")


def _make_fused_kernel(num_obs: int, num_trunk_layers: int, activation: str):
    """one-hot (in-register) -> trunk Linear+act (xL) -> head Linear."""

    def kernel(idx_ref, *refs):
        # refs = (W1, b1, ..., W_L, b_L, W_head, b_head, out)
        out_ref = refs[-1]
        wrefs = refs[:-1]

        idx = idx_ref[...]                                    # (tile_b, 1) i32
        tile_b = idx.shape[0]

        # One-hot built in registers; never touches HBM. Feeding it into the
        # first jnp.dot is the fused row-gather of W1 on the MXU.
        classes = lax.broadcasted_iota(jnp.int32, (tile_b, num_obs), 1)
        h = (classes == idx).astype(jnp.float32)              # (tile_b, num_obs)

        # Trunk: Linear + activation, repeated.
        for l in range(num_trunk_layers):
            w = wrefs[2 * l][...]
            b = wrefs[2 * l + 1][...]
            h = jnp.dot(h, w, preferred_element_type=jnp.float32) + b
            h = _apply_activation(h, activation)

        # Policy head: Linear, no activation.
        w_head = wrefs[2 * num_trunk_layers][...]
        b_head = wrefs[2 * num_trunk_layers + 1][...]
        logits = jnp.dot(h, w_head, preferred_element_type=jnp.float32) + b_head
        out_ref[...] = logits.astype(out_ref.dtype)

    return kernel


def ppo_categorical_policy_mlp(obs, trunk_params, head_params, *, num_obs,
                               activation="tanh", tile_b=None):
    """Fused forward of PPOCategoricalPolicyMLP (Discrete observation space).

    obs:          (B,) integer observation indices.
    trunk_params: list of (W, b); W_1 is (num_obs, H), later layers (H, H).
    head_params:  (W_head, b_head) with W_head (H, num_actions).
    Returns logits of shape (B, num_actions), float32.
    """
    # TODO(synk): only the Discrete/one-hot trunk is fused here; the Box-input
    # and nn.Embedding trunk variants of PPOTrunkMLP are not implemented.
    obs = jnp.asarray(obs)
    batch = obs.shape[0]
    w_head, _ = head_params
    num_actions = w_head.shape[1]

    # Batch tile: multiple of 8 sublanes; 256 keeps the MXU M-dim well fed on
    # v6e/v7x while (tile_b, H) activations + double-buffered tiles stay far
    # under the v7x 64 MiB VMEM budget.
    if tile_b is None:
        tile_b = min(256, _round_up(batch, 8))
    tile_b = _round_up(tile_b, 8)
    b_pad = _round_up(batch, tile_b)

    # int32 indices as a (B_pad, 1) column (a few bytes per tile); padded rows
    # use class 0 and are sliced away below.
    idx = obs.astype(jnp.int32).reshape(-1, 1)
    if b_pad != batch:
        idx = jnp.pad(idx, ((0, b_pad - batch), (0, 0)))

    # Flatten params to [W1, b1, ..., WL, bL, Whead, bhead] with 2-D biases.
    flat_params = []
    for w, b in list(trunk_params) + [head_params]:
        flat_params.append(w.astype(jnp.float32))
        flat_params.append(b.astype(jnp.float32).reshape(1, -1))

    # Weights/biases: full-array blocks with constant index_map -> fetched into
    # VMEM once and kept resident across all batch tiles.
    param_specs = [pl.BlockSpec(p.shape, lambda i: (0, 0)) for p in flat_params]

    kernel = _make_fused_kernel(num_obs, len(trunk_params), activation)

    out = pl.pallas_call(
        kernel,
        out_shape=jax.ShapeDtypeStruct((b_pad, num_actions), jnp.float32),
        grid_spec=pltpu.PrefetchScalarGridSpec(
            num_scalar_prefetch=0,
            grid=(b_pad // tile_b,),
            in_specs=[pl.BlockSpec((tile_b, 1), lambda i: (i, 0))] + param_specs,
            out_specs=pl.BlockSpec((tile_b, num_actions), lambda i: (i, 0)),
        ),
        compiler_params=pltpu.CompilerParams(
            # "parallel": lets v7x shard batch tiles across its 2 TensorCores.
            dimension_semantics=("parallel",)),
    )(idx, *flat_params)

    return out[:batch]


if __name__ == "__main__":
    # Small config consistent with PPOCategoricalPolicyMLP on a Discrete env:
    #   observation_space.n = 16, num_layers = 2, layer_size = 32,
    #   activation = 'tanh', action_space.n = 4, batch = 8.
    num_obs, layer_size, num_layers, num_actions, batch = 16, 32, 2, 4, 8
    activation = "tanh"

    key = jax.random.PRNGKey(0)
    keys = jax.random.split(key, 1 + 2 * (num_layers + 1))
    k_obs, k_params = keys[0], list(keys[1:])

    obs = jax.random.randint(k_obs, (batch,), 0, num_obs, dtype=jnp.int32)

    trunk_params = []
    in_dim = num_obs
    ki = iter(k_params)
    for _ in range(num_layers):
        w = jax.random.normal(next(ki), (in_dim, layer_size), jnp.float32) * 0.1
        b = jax.random.normal(next(ki), (layer_size,), jnp.float32) * 0.1
        trunk_params.append((w, b))
        in_dim = layer_size
    w_head = jax.random.normal(next(ki), (in_dim, num_actions), jnp.float32) * 0.1
    b_head = jax.random.normal(next(ki), (num_actions,), jnp.float32) * 0.1
    head_params = (w_head, b_head)

    logits = ppo_categorical_policy_mlp(
        obs, trunk_params, head_params, num_obs=num_obs, activation=activation)
    logits = jax.block_until_ready(logits)

    # Pure-JAX reference mirroring the PyTorch module.
    h = jax.nn.one_hot(obs, num_obs, dtype=jnp.float32)
    for w, b in trunk_params:
        h = jnp.tanh(
            jnp.matmul(h, w, precision=jax.lax.Precision.HIGHEST) + b)
    ref = jnp.matmul(h, w_head, precision=jax.lax.Precision.HIGHEST) + b_head

    assert logits.shape == (batch, num_actions) and logits.dtype == jnp.float32
    err = float(jnp.max(jnp.abs(logits - ref)))
    assert jnp.allclose(logits, ref, atol=1e-3, rtol=1e-3), err

    print("KERNEL_OK")
</pallas_src>

<mosaic_0001>
module attributes {stable_mosaic.version = 11 : i64} {
  func.func @kernel(%arg0: i32, %arg1: memref<8x1xi32, #tpu.memory_space<vmem>>, %arg2: memref<16x32xf32, #tpu.memory_space<vmem>>, %arg3: memref<1x32xf32, #tpu.memory_space<vmem>>, %arg4: memref<32x32xf32, #tpu.memory_space<vmem>>, %arg5: memref<1x32xf32, #tpu.memory_space<vmem>>, %arg6: memref<32x4xf32, #tpu.memory_space<vmem>>, %arg7: memref<1x4xf32, #tpu.memory_space<vmem>>, %arg8: memref<8x4xf32, #tpu.memory_space<vmem>>) attributes {dimension_semantics = [#tpu.dimension_semantics<parallel>], iteration_bounds = array<i64: 1>, scalar_prefetch = 0 : i64, scratch_operands = 0 : i64, tpu.core_type = #tpu.core_type<tc>, window_params = [{transform_indices = @transform_0, window_bounds = array<i64: 8, 1>}, {pipeline_mode = #tpu.pipeline_mode<synchronous>, transform_indices = @transform_1, window_bounds = array<i64: 16, 32>}, {pipeline_mode = #tpu.pipeline_mode<synchronous>, transform_indices = @transform_2, window_bounds = array<i64: 1, 32>}, {pipeline_mode = #tpu.pipeline_mode<synchronous>, transform_indices = @transform_3, window_bounds = array<i64: 32, 32>}, {pipeline_mode = #tpu.pipeline_mode<synchronous>, transform_indices = @transform_4, window_bounds = array<i64: 1, 32>}, {pipeline_mode = #tpu.pipeline_mode<synchronous>, transform_indices = @transform_5, window_bounds = array<i64: 32, 4>}, {pipeline_mode = #tpu.pipeline_mode<synchronous>, transform_indices = @transform_6, window_bounds = array<i64: 1, 4>}, {transform_indices = @transform_7, window_bounds = array<i64: 8, 4>}]} {
    %c0 = arith.constant 0 : index
    %c0_0 = arith.constant 0 : index
    %0 = vector.load %arg1[%c0, %c0_0] : memref<8x1xi32, #tpu.memory_space<vmem>>, vector<8x1xi32>
    %1 = tpu.iota {dimensions = array<i32: 1>} : vector<8x16xi32>
    %2 = vector.broadcast %0 : vector<8x1xi32> to vector<8x16xi32>
    %3 = arith.cmpi eq, %1, %2 : vector<8x16xi32>
    %4 = arith.extui %3 : vector<8x16xi1> to vector<8x16xi32>
    %5 = arith.sitofp %4 : vector<8x16xi32> to vector<8x16xf32>
    %c0_1 = arith.constant 0 : index
    %c0_2 = arith.constant 0 : index
    %6 = vector.load %arg2[%c0_1, %c0_2] : memref<16x32xf32, #tpu.memory_space<vmem>>, vector<16x32xf32>
    %c0_3 = arith.constant 0 : index
    %c0_4 = arith.constant 0 : index
    %7 = vector.load %arg3[%c0_3, %c0_4] : memref<1x32xf32, #tpu.memory_space<vmem>>, vector<1x32xf32>
    %cst = arith.constant dense<0.000000e+00> : vector<8x32xf32>
    %8 = tpu.matmul %5, %6, %cst {dimension_numbers = #tpu.dot_dimension_numbers<[1], [0], [0], [1], [0, 0, 1, 1], [], []>} : vector<8x16xf32>, vector<16x32xf32>, vector<8x32xf32> -> vector<8x32xf32>
    %9 = vector.broadcast %7 : vector<1x32xf32> to vector<8x32xf32>
    %10 = arith.addf %8, %9 : vector<8x32xf32>
    %11 = math.tanh %10 : vector<8x32xf32>
    %c0_5 = arith.constant 0 : index
    %c0_6 = arith.constant 0 : index
    %12 = vector.load %arg4[%c0_5, %c0_6] : memref<32x32xf32, #tpu.memory_space<vmem>>, vector<32x32xf32>
    %c0_7 = arith.constant 0 : index
    %c0_8 = arith.constant 0 : index
    %13 = vector.load %arg5[%c0_7, %c0_8] : memref<1x32xf32, #tpu.memory_space<vmem>>, vector<1x32xf32>
    %cst_9 = arith.constant dense<0.000000e+00> : vector<8x32xf32>
    %14 = tpu.matmul %11, %12, %cst_9 {dimension_numbers = #tpu.dot_dimension_numbers<[1], [0], [0], [1], [0, 0, 1, 1], [], []>} : vector<8x32xf32>, vector<32x32xf32>, vector<8x32xf32> -> vector<8x32xf32>
    %15 = vector.broadcast %13 : vector<1x32xf32> to vector<8x32xf32>
    %16 = arith.addf %14, %15 : vector<8x32xf32>
    %17 = math.tanh %16 : vector<8x32xf32>
    %c0_10 = arith.constant 0 : index
    %c0_11 = arith.constant 0 : index
    %18 = vector.load %arg6[%c0_10, %c0_11] : memref<32x4xf32, #tpu.memory_space<vmem>>, vector<32x4xf32>
    %c0_12 = arith.constant 0 : index
    %c0_13 = arith.constant 0 : index
    %19 = vector.load %arg7[%c0_12, %c0_13] : memref<1x4xf32, #tpu.memory_space<vmem>>, vector<1x4xf32>
    %cst_14 = arith.constant dense<0.000000e+00> : vector<8x4xf32>
    %20 = tpu.matmul %17, %18, %cst_14 {dimension_numbers = #tpu.dot_dimension_numbers<[1], [0], [0], [1], [0, 0, 1, 1], [], []>} : vector<8x32xf32>, vector<32x4xf32>, vector<8x4xf32> -> vector<8x4xf32>
    %21 = vector.broadcast %19 : vector<1x4xf32> to vector<8x4xf32>
    %22 = arith.addf %20, %21 : vector<8x4xf32>
    %c0_15 = arith.constant 0 : index
    %c0_16 = arith.constant 0 : index
    %23 = vector.load %arg8[%c0_15, %c0_16] : memref<8x4xf32, #tpu.memory_space<vmem>>, vector<8x4xf32>
    tpu.vector_store %arg8[%c0_15, %c0_16], %22 {strides = array<i32>} : memref<8x4xf32, #tpu.memory_space<vmem>>, vector<8x4xf32>,
    return
  }
  func.func @transform_0(%arg0: i32) -> (i32, i32) {
    %c0_i32 = arith.constant 0 : i32
    %c0_i32_0 = arith.constant 0 : i32
    return %arg0, %c0_i32 : i32, i32
  }
  func.func @transform_1(%arg0: i32) -> (i32, i32) {
    %c0_i32 = arith.constant 0 : i32
    %c0_i32_0 = arith.constant 0 : i32
    %c0_i32_1 = arith.constant 0 : i32
    return %c0_i32, %c0_i32_0 : i32, i32
  }
  func.func @transform_2(%arg0: i32) -> (i32, i32) {
    %c0_i32 = arith.constant 0 : i32
    %c0_i32_0 = arith.constant 0 : i32
    %c0_i32_1 = arith.constant 0 : i32
    return %c0_i32, %c0_i32_0 : i32, i32
  }
  func.func @transform_3(%arg0: i32) -> (i32, i32) {
    %c0_i32 = arith.constant 0 : i32
    %c0_i32_0 = arith.constant 0 : i32
    %c0_i32_1 = arith.constant 0 : i32
    return %c0_i32, %c0_i32_0 : i32, i32
  }
  func.func @transform_4(%arg0: i32) -> (i32, i32) {
    %c0_i32 = arith.constant 0 : i32
    %c0_i32_0 = arith.constant 0 : i32
    %c0_i32_1 = arith.constant 0 : i32
    return %c0_i32, %c0_i32_0 : i32, i32
  }
  func.func @transform_5(%arg0: i32) -> (i32, i32) {
    %c0_i32 = arith.constant 0 : i32
    %c0_i32_0 = arith.constant 0 : i32
    %c0_i32_1 = arith.constant 0 : i32
    return %c0_i32, %c0_i32_0 : i32, i32
  }
  func.func @transform_6(%arg0: i32) -> (i32, i32) {
    %c0_i32 = arith.constant 0 : i32
    %c0_i32_0 = arith.constant 0 : i32
    %c0_i32_1 = arith.constant 0 : i32
    return %c0_i32, %c0_i32_0 : i32, i32
  }
  func.func @transform_7(%arg0: i32) -> (i32, i32) {
    %c0_i32 = arith.constant 0 : i32
    %c0_i32_0 = arith.constant 0 : i32
    return %arg0, %c0_i32 : i32, i32
  }
}

</mosaic_0001>

<llo_original>
// kernel: tpu_custom_call.1
$region0: #{tpu_custom_call.1}
  #allocation0 [shape = 'u32[]', space=smem, size = 0x4, offset = 0x4, fixed_abs, tag = 'smem constant byte address 0x4 - core index']
  #allocation1 [shape = 'u32[144,128]{1,0:T(1,128)}', space=vmem, size = 0x12000, scoped, tag = 'internal scratch']
  %s0 = inlined_call_operand.vmem [shape: s32[8,1], index: 0, kind: input, shape index: {}]
  %s1 = inlined_call_operand.vmem [shape: f32[16,32], index: 1, kind: input, shape index: {}]
  %s2 = inlined_call_operand.hbm [shape: f32[1,32], index: 2, kind: input, shape index: {}]
  %s3 = inlined_call_operand.vmem [shape: f32[32,32], index: 3, kind: input, shape index: {}]
  %s4 = inlined_call_operand.hbm [shape: f32[1,32], index: 4, kind: input, shape index: {}]
  %s5 = inlined_call_operand.vmem [shape: f32[32,4], index: 5, kind: input, shape index: {}]
  %s6 = inlined_call_operand.vmem [shape: f32[1,4], index: 6, kind: input, shape index: {}]
  %s7 = inlined_call_operand.vmem [shape: f32[8,4], index: 7, kind: output, shape index: {}]
  %s8 = sld [smem:[#allocation0]]
  $region46: #{tpu_custom_call.1} parent=0
    _
  %s10 = ssub.s32 1, %s8
  %s11 = scalar_select 0, %s10, %s8
  $region1: #{tpu_custom_call.1} parent=0
    #allocation2 [shape = 'u8[512]{0}', space=vmem, size = 0x400, scoped, tag = 'input window, operand 2, single buffered']
    #allocation3 [shape = 's32[1]{0}', space=sflag, size = 0x4, scoped, tag = 'scoped memory for tpu_custom_call.1']
    #allocation4 [shape = 'u8[512]{0}', space=vmem, size = 0x400, scoped, tag = 'input window, operand 4, single buffered']
    #allocation5 [shape = 's32[1]{0}', space=sflag, size = 0x4, scoped, tag = 'scoped memory for tpu_custom_call.1']
    %12 = vsyncpa [#allocation3], 0
    %13 = vsyncpa [#allocation5], 0
    // Predicated region
    $region2: #{tpu_custom_call.1} parent=1 // pred_check
      _
    $region3: #{tpu_custom_call.1} parent=1 // pred_check_branch
      %15 = sbr.rel (0) target = $region5
    $region4: #{tpu_custom_call.1} parent=1 // pred_region
      _
    $region5: #{tpu_custom_call.1} parent=1 // pred_fallthru
      _
    // Predicated region
    $region6: #{tpu_custom_call.1} parent=1 // pred_check
      _
    $region7: #{tpu_custom_call.1} parent=1 // pred_check_branch
      %17 = sbr.rel (0) target = $region9
    $region8: #{tpu_custom_call.1} parent=1 // pred_region
      _
    $region9: #{tpu_custom_call.1} parent=1 // pred_fallthru
      _
    // Predicated region
    $region10: #{tpu_custom_call.1} parent=1 // pred_check
      _
    $region11: #{tpu_custom_call.1} parent=1 // pred_check_branch
      %19 = sbr.rel (0) target = $region13
    $region12: #{tpu_custom_call.1} parent=1 // pred_region
      %s21 = ssub.s32 16, 16
      %22 = vsyncadd [#allocation3], %s21
      %s24 = sshll.u32 [#allocation2], 4
      %s25 = int_to_ptr.vmem [resolvable:$true] %s24
      %27 = dma.hbm_to_vmem [thread:$0]  %s2, 16, %s25, [#allocation3]
    $region13: #{tpu_custom_call.1} parent=1 // pred_fallthru
      _
    // Predicated region
    $region14: #{tpu_custom_call.1} parent=1 // pred_check
      _
    $region15: #{tpu_custom_call.1} parent=1 // pred_check_branch
      %29 = sbr.rel (0) target = $region17
    $region16: #{tpu_custom_call.1} parent=1 // pred_region
      _
    $region17: #{tpu_custom_call.1} parent=1 // pred_fallthru
      _
    // Predicated region
    $region18: #{tpu_custom_call.1} parent=1 // pred_check
      _
    $region19: #{tpu_custom_call.1} parent=1 // pred_check_branch
      %31 = sbr.rel (0) target = $region21
    $region20: #{tpu_custom_call.1} parent=1 // pred_region
      %s33 = ssub.s32 16, 16
      %34 = vsyncadd [#allocation5], %s33
      %s36 = sshll.u32 [#allocation4], 4
      %s37 = int_to_ptr.vmem [resolvable:$true] %s36
      %39 = dma.hbm_to_vmem [thread:$0]  %s4, 16, %s37, [#allocation5]
    $region21: #{tpu_custom_call.1} parent=1 // pred_fallthru
      _
    // Predicated region
    $region22: #{tpu_custom_call.1} parent=1 // pred_check
      _
    $region23: #{tpu_custom_call.1} parent=1 // pred_check_branch
      %41 = sbr.rel (0) target = $region25
    $region24: #{tpu_custom_call.1} parent=1 // pred_region
      _
    $region25: #{tpu_custom_call.1} parent=1 // pred_fallthru
      _
    // Predicated region
    $region26: #{tpu_custom_call.1} parent=1 // pred_check
      _
    $region27: #{tpu_custom_call.1} parent=1 // pred_check_branch
      %43 = sbr.rel (0) target = $region29
    $region28: #{tpu_custom_call.1} parent=1 // pred_region
      _
    $region29: #{tpu_custom_call.1} parent=1 // pred_fallthru
      _
    // Predicated region
    $region30: #{tpu_custom_call.1} parent=1 // pred_check
      _
    $region31: #{tpu_custom_call.1} parent=1 // pred_check_branch
      %45 = sbr.rel (0) target = $region33
    $region32: #{tpu_custom_call.1} parent=1 // pred_region
      %46 = dma.done [#allocation3], 16
    $region33: #{tpu_custom_call.1} parent=1 // pred_fallthru
      _
    // Predicated region
    $region34: #{tpu_custom_call.1} parent=1 // pred_check
      _
    $region35: #{tpu_custom_call.1} parent=1 // pred_check_branch
      %48 = sbr.rel (0) target = $region37
    $region36: #{tpu_custom_call.1} parent=1 // pred_region
      %49 = dma.done [#allocation5], 16
    $region37: #{tpu_custom_call.1} parent=1 // pred_fallthru
      _
    %v50 = vld [vmem:[%s0] sm:$0xff]
    %v51 = vlaneseq
    %v52 = vand.u32 %v51, 127
    %53 = vset.pattern.permute.xlu0 0
    %54 = vperm.xlu0 %53, %v50
    %v55 = vpop.permute.xlu0 %54
    %vm56 = vcmp.eq.s32.totalorder %v52, %v55
    %v57 = vsel %vm56, 1, 0
    %v58 = vcvt.s32.f32 %v57
    %v59 = vld [vmem:[%s1] sm:$0xff]
    %v60 = vld [vmem:[%s1 + $0x8] sm:$0xff]
    %v61 = vld [vmem:[#allocation2] sm:$0x1]
    %v63 = vlaneseq
    %v64 = vshrl.u32 %v63, 7
    %v65 = vsub.s32 0, %v64
    %v66 = vrot.slane %v61, %v65
    %vm68 = vcmask 130048
    %v70 = vsel %vm68, %v58, 0
    %72 = vmatprep.subr.mxu0 0.0
    %73 = vmatpush1.msra.mxu0 0.0
    %74 = vmatprep.subr.mxu0 0.0
    %75 = vmatpush1.msra.mxu0 0.0
    %76 = vmatprep.subr.mxu0 0.0
    %77 = vmatpush1.msra.mxu0 0.0
    %78 = vmatprep.subr.mxu0 0.0
    %79 = vmatpush1.msra.mxu0 0.0
    %80 = vmatprep.subr.mxu0 0.0
    %81 = vmatpush1.msra.mxu0 0.0
    %82 = vmatprep.subr.mxu0 0.0
    %83 = vmatpush1.msra.mxu0 0.0
    %84 = vmatprep.subr.mxu0 0.0
    %85 = vmatpush1.msra.mxu0 0.0
    %86 = vmatprep.subr.mxu0 0.0
    %87 = vmatpush1.msra.mxu0 0.0
    %88 = vmatprep.subr.mxu0 0.0
    %89 = vmatpush1.msra.mxu0 0.0
    %90 = vmatprep.subr.mxu0 0.0
    %91 = vmatpush1.msra.mxu0 0.0
    %92 = vmatprep.subr.mxu0 0.0
    %93 = vmatpush1.msra.mxu0 0.0
    %94 = vmatprep.subr.mxu0 0.0
    %95 = vmatpush1.msra.mxu0 0.0
    %96 = vmatprep.subr.mxu0 0.0
    %97 = vmatpush1.msra.mxu0 0.0
    %98 = vmatprep.subr.mxu0 0.0
    %99 = vmatpush1.msra.mxu0 0.0
    %100 = vmatprep.subr.mxu0 0.0
    %101 = vmatpush1.msra.mxu0 %v60
    %102 = vmatprep.subr.mxu0 0.0
    %103 = vmatpush1.msra.mxu0 %v59
    %104 = vmatprep.subr.mxu0 0.0
    %105 = vmatpush2.msra.mxu0 0.0
    %106 = vmatprep.subr.mxu0 0.0
    %107 = vmatpush2.msra.mxu0 0.0
    %108 = vmatprep.subr.mxu0 0.0
    %109 = vmatpush2.msra.mxu0 0.0
    %110 = vmatprep.subr.mxu0 0.0
    %111 = vmatpush2.msra.mxu0 0.0
    %112 = vmatprep.subr.mxu0 0.0
    %113 = vmatpush2.msra.mxu0 0.0
    %114 = vmatprep.subr.mxu0 0.0
    %115 = vmatpush2.msra.mxu0 0.0
    %116 = vmatprep.subr.mxu0 0.0
    %117 = vmatpush2.msra.mxu0 0.0
    %118 = vmatprep.subr.mxu0 0.0
    %119 = vmatpush2.msra.mxu0 0.0
    %120 = vmatprep.subr.mxu0 0.0
    %121 = vmatpush2.msra.mxu0 0.0
    %122 = vmatprep.subr.mxu0 0.0
    %123 = vmatpush2.msra.mxu0 0.0
    %124 = vmatprep.subr.mxu0 0.0
    %125 = vmatpush2.msra.mxu0 0.0
    %126 = vmatprep.subr.mxu0 0.0
    %127 = vmatpush2.msra.mxu0 0.0
    %128 = vmatprep.subr.mxu0 0.0
    %129 = vmatpush2.msra.mxu0 0.0
    %130 = vmatprep.subr.mxu0 0.0
    %131 = vmatpush2.msra.mxu0 0.0
    %132 = vmatprep.subr.mxu0 0.0
    %133 = vmatpush2.msra.mxu0 0.0
    %134 = vmatprep.subr.mxu0 0.0
    %135 = vmatpush2.msra.mxu0 0.0
    %136 = vmatprep.mubr.f32.mxu0 0.0
    %137 = vmatmul.mubr.f32.gmra.mxu0 %v70
    %v138 = vpop.f32.mrf.mxu0
    %v139 = vadd.f32 %v66, %v138
    %v140 = vpop.f32.mrf.mxu0
    %141 = vdwg.mxu0
    %v142 = vtanh.pop %v139
    %v143 = vld [vmem:[%s3] sm:$0xff]
    %v144 = vld [vmem:[%s3 + $0x8] sm:$0xff]
    %v145 = vld [vmem:[%s3 + $0x10] sm:$0xff]
    %v146 = vld [vmem:[%s3 + $0x18] sm:$0xff]
    %v147 = vld [vmem:[#allocation4] sm:$0x1]
    %v149 = vlaneseq
    %v150 = vshrl.u32 %v149, 7
    %v151 = vsub.s32 0, %v150
    %v152 = vrot.slane %v147, %v151
    %vm154 = vcmask 261120
    %v156 = vsel %vm154, %v142, 0
    %158 = vmatprep.subr.mxu0 0.0
    %159 = vmatpush1.msra.mxu0 0.0
    %160 = vmatprep.subr.mxu0 0.0
    %161 = vmatpush1.msra.mxu0 0.0
    %162 = vmatprep.subr.mxu0 0.0
    %163 = vmatpush1.msra.mxu0 0.0
    %164 = vmatprep.subr.mxu0 0.0
    %165 = vmatpush1.msra.mxu0 0.0
    %166 = vmatprep.subr.mxu0 0.0
    %167 = vmatpush1.msra.mxu0 0.0
    %168 = vmatprep.subr.mxu0 0.0
    %169 = vmatpush1.msra.mxu0 0.0
    %170 = vmatprep.subr.mxu0 0.0
    %171 = vmatpush1.msra.mxu0 0.0
    %172 = vmatprep.subr.mxu0 0.0
    %173 = vmatpush1.msra.mxu0 0.0
    %174 = vmatprep.subr.mxu0 0.0
    %175 = vmatpush1.msra.mxu0 0.0
    %176 = vmatprep.subr.mxu0 0.0
    %177 = vmatpush1.msra.mxu0 0.0
    %178 = vmatprep.subr.mxu0 0.0
    %179 = vmatpush1.msra.mxu0 0.0
    %180 = vmatprep.subr.mxu0 0.0
    %181 = vmatpush1.msra.mxu0 0.0
    %182 = vmatprep.subr.mxu0 0.0
    %183 = vmatpush1.msra.mxu0 %v146
    %184 = vmatprep.subr.mxu0 0.0
    %185 = vmatpush1.msra.mxu0 %v145
    %186 = vmatprep.subr.mxu0 0.0
    %187 = vmatpush1.msra.mxu0 %v144
    %188 = vmatprep.subr.mxu0 0.0
    %189 = vmatpush1.msra.mxu0 %v143
    %190 = vmatprep.subr.mxu0 0.0
    %191 = vmatpush2.msra.mxu0 0.0
    %192 = vmatprep.subr.mxu0 0.0
    %193 = vmatpush2.msra.mxu0 0.0
    %194 = vmatprep.subr.mxu0 0.0
    %195 = vmatpush2.msra.mxu0 0.0
    %196 = vmatprep.subr.mxu0 0.0
    %197 = vmatpush2.msra.mxu0 0.0
    %198 = vmatprep.subr.mxu0 0.0
    %199 = vmatpush2.msra.mxu0 0.0
    %200 = vmatprep.subr.mxu0 0.0
    %201 = vmatpush2.msra.mxu0 0.0
    %202 = vmatprep.subr.mxu0 0.0
    %203 = vmatpush2.msra.mxu0 0.0
    %204 = vmatprep.subr.mxu0 0.0
    %205 = vmatpush2.msra.mxu0 0.0
    %206 = vmatprep.subr.mxu0 0.0
    %207 = vmatpush2.msra.mxu0 0.0
    %208 = vmatprep.subr.mxu0 0.0
    %209 = vmatpush2.msra.mxu0 0.0
    %210 = vmatprep.subr.mxu0 0.0
    %211 = vmatpush2.msra.mxu0 0.0
    %212 = vmatprep.subr.mxu0 0.0
    %213 = vmatpush2.msra.mxu0 0.0
    %214 = vmatprep.subr.mxu0 0.0
    %215 = vmatpush2.msra.mxu0 0.0
    %216 = vmatprep.subr.mxu0 0.0
    %217 = vmatpush2.msra.mxu0 0.0
    %218 = vmatprep.subr.mxu0 0.0
    %219 = vmatpush2.msra.mxu0 0.0
    %220 = vmatprep.subr.mxu0 0.0
    %221 = vmatpush2.msra.mxu0 0.0
    %222 = vmatprep.mubr.f32.mxu0 0.0
    %223 = vmatmul.mubr.f32.gmra.mxu0 %v156
    %v224 = vpop.f32.mrf.mxu0
    %v225 = vadd.f32 %v152, %v224
    %v226 = vpop.f32.mrf.mxu0
    %227 = vdwg.mxu0
    %v228 = vtanh.pop %v225
    %v229 = vld [vmem:[%s5] sm:$0xff]
    %v230 = vld [vmem:[%s5 + $0x8] sm:$0xff]
    %v231 = vld [vmem:[%s5 + $0x10] sm:$0xff]
    %v232 = vld [vmem:[%s5 + $0x18] sm:$0xff]
    %v233 = vld [vmem:[%s6] sm:$0x1]
    %v235 = vlaneseq
    %v236 = vshrl.u32 %v235, 7
    %v237 = vsub.s32 0, %v236
    %v238 = vrot.slane %v233, %v237
    %v241 = vsel %vm154, %v228, 0
    %243 = vmatprep.subr.mxu0 0.0
    %244 = vmatpush1.msra.mxu0 0.0
    %245 = vmatprep.subr.mxu0 0.0
    %246 = vmatpush1.msra.mxu0 0.0
    %247 = vmatprep.subr.mxu0 0.0
    %248 = vmatpush1.msra.mxu0 0.0
    %249 = vmatprep.subr.mxu0 0.0
    %250 = vmatpush1.msra.mxu0 0.0
    %251 = vmatprep.subr.mxu0 0.0
    %252 = vmatpush1.msra.mxu0 0.0
    %253 = vmatprep.subr.mxu0 0.0
    %254 = vmatpush1.msra.mxu0 0.0
    %255 = vmatprep.subr.mxu0 0.0
    %256 = vmatpush1.msra.mxu0 0.0
    %257 = vmatprep.subr.mxu0 0.0
    %258 = vmatpush1.msra.mxu0 0.0
    %259 = vmatprep.subr.mxu0 0.0
    %260 = vmatpush1.msra.mxu0 0.0
    %261 = vmatprep.subr.mxu0 0.0
    %262 = vmatpush1.msra.mxu0 0.0
    %263 = vmatprep.subr.mxu0 0.0
    %264 = vmatpush1.msra.mxu0 0.0
    %265 = vmatprep.subr.mxu0 0.0
    %266 = vmatpush1.msra.mxu0 0.0
    %267 = vmatprep.subr.mxu0 0.0
    %268 = vmatpush1.msra.mxu0 %v232
    %269 = vmatprep.subr.mxu0 0.0
    %270 = vmatpush1.msra.mxu0 %v231
    %271 = vmatprep.subr.mxu0 0.0
    %272 = vmatpush1.msra.mxu0 %v230
    %273 = vmatprep.subr.mxu0 0.0
    %274 = vmatpush1.msra.mxu0 %v229
    %275 = vmatprep.subr.mxu0 0.0
    %276 = vmatpush2.msra.mxu0 0.0
    %277 = vmatprep.subr.mxu0 0.0
    %278 = vmatpush2.msra.mxu0 0.0
    %279 = vmatprep.subr.mxu0 0.0
    %280 = vmatpush2.msra.mxu0 0.0
    %281 = vmatprep.subr.mxu0 0.0
    %282 = vmatpush2.msra.mxu0 0.0
    %283 = vmatprep.subr.mxu0 0.0
    %284 = vmatpush2.msra.mxu0 0.0
    %285 = vmatprep.subr.mxu0 0.0
    %286 = vmatpush2.msra.mxu0 0.0
    %287 = vmatprep.subr.mxu0 0.0
    %288 = vmatpush2.msra.mxu0 0.0
    %289 = vmatprep.subr.mxu0 0.0
    %290 = vmatpush2.msra.mxu0 0.0
    %291 = vmatprep.subr.mxu0 0.0
    %292 = vmatpush2.msra.mxu0 0.0
    %293 = vmatprep.subr.mxu0 0.0
    %294 = vmatpush2.msra.mxu0 0.0
    %295 = vmatprep.subr.mxu0 0.0
    %296 = vmatpush2.msra.mxu0 0.0
    %297 = vmatprep.subr.mxu0 0.0
    %298 = vmatpush2.msra.mxu0 0.0
    %299 = vmatprep.subr.mxu0 0.0
    %300 = vmatpush2.msra.mxu0 0.0
    %301 = vmatprep.subr.mxu0 0.0
    %302 = vmatpush2.msra.mxu0 0.0
    %303 = vmatprep.subr.mxu0 0.0
    %304 = vmatpush2.msra.mxu0 0.0
    %305 = vmatprep.subr.mxu0 0.0
    %306 = vmatpush2.msra.mxu0 0.0
    %307 = vmatprep.mubr.f32.mxu0 0.0
    %308 = vmatmul.mubr.f32.gmra.mxu0 %v241
    %v309 = vpop.f32.mrf.mxu0
    %v310 = vadd.f32 %v238, %v309
    %v311 = vpop.f32.mrf.mxu0
    %312 = vdwg.mxu0
    %vm313 = vcmask 31744
    %314 = vst.msk [vmem:[%s7] sm:$0xff] %vm313, %v310
    // Predicated region
    $region38: #{tpu_custom_call.1} parent=1 // pred_check
      _
    $region39: #{tpu_custom_call.1} parent=1 // pred_check_branch
      %316 = sbr.rel (0) target = $region41
    $region40: #{tpu_custom_call.1} parent=1 // pred_region
      _
    $region41: #{tpu_custom_call.1} parent=1 // pred_fallthru
      _
    // Predicated region
    $region42: #{tpu_custom_call.1} parent=1 // pred_check
      _
    $region43: #{tpu_custom_call.1} parent=1 // pred_check_branch
      %318 = sbr.rel (0) target = $region45
    $region44: #{tpu_custom_call.1} parent=1 // pred_region
      _
    $region45: #{tpu_custom_call.1} parent=1 // pred_fallthru
      _
    %319 = vsyncpa [#allocation3], 1
    %320 = vsyncpa [#allocation5], 1

</llo_original>
